<compile_context>
chip_gen: v7x
topology: tpu7x:2x2x1
jax: 0.10.0
libtpu: 0.0.40
codegen_flags: <defaults>
</compile_context>

<pallas_src>
import math

import jax
import jax.numpy as jnp
from jax.experimental import pallas as pl
from jax.experimental.pallas import tpu as pltpu


def _round_up(x, m):
    return (x + m - 1) // m * m


# ----------------------------------------------------------------------------
# Kernel 1: hidden MLP  h = relu(x @ W1 + b1) @ W2 + b2      (bf16 in/out)
# ----------------------------------------------------------------------------
def _hidden_mlp_kernel(x_ref, w1_ref, b1_ref, w2_ref, b2_ref, h_ref):
    h1 = jnp.dot(x_ref[...], w1_ref[...], preferred_element_type=jnp.float32)
    h1 = jnp.maximum(h1 + b1_ref[...], 0.0)                      # ReLU
    h2 = jnp.dot(h1.astype(w2_ref.dtype), w2_ref[...],
                 preferred_element_type=jnp.float32) + b2_ref[...]
    h_ref[...] = h2.astype(h_ref.dtype)


# ----------------------------------------------------------------------------
# Kernel 2: denoise  logits = h @ W3 + b3   (bf16 inputs, f32 accumulate/out)
# ----------------------------------------------------------------------------
def _denoise_kernel(h_ref, w3_ref, b3_ref, out_ref):
    out_ref[...] = (jnp.dot(h_ref[...], w3_ref[...],
                            preferred_element_type=jnp.float32)
                    + b3_ref[...]).astype(out_ref.dtype)


def mdb_mlp_pallas(x_cat, params, *, tile_v=512, tile_m=256):
    """x_cat: (M, 2E) float -> logits (M, V) float32 via two Pallas kernels."""
    w1 = params["w1"].astype(jnp.bfloat16)   # (2E, H)
    b1 = params["b1"].astype(jnp.float32)    # (1, H)
    w2 = params["w2"].astype(jnp.bfloat16)   # (H, E)
    b2 = params["b2"].astype(jnp.float32)    # (1, E)
    w3 = params["w3"].astype(jnp.bfloat16)   # (E, V)
    b3 = params["b3"].astype(jnp.float32)    # (1, V)

    M, twoE = x_cat.shape
    H = w1.shape[1]
    E = w2.shape[1]
    V = w3.shape[1]

    # Vocab tile: lane-dense multiple of 128 that divides V.
    assert V % 128 == 0, "vocab_size must be a multiple of 128 for lane tiling"
    tv = tile_v
    while V % tv != 0:
        tv //= 2
    assert tv >= 128 and V % tv == 0

    # Row tile: fixed size (bounded VMEM), 16-aligned for bf16 sublane packing.
    tm = min(tile_m, _round_up(M, 16))
    tm = _round_up(tm, 16)
    M_pad = _round_up(M, tm)

    x_pad = jnp.pad(x_cat.astype(jnp.bfloat16), ((0, M_pad - M), (0, 0)))

    def _clamp_vmem(nbytes):
        return int(min(max(nbytes, 16 << 20), 48 << 20))

    # ---- hidden MLP: grid over row tiles only -------------------------------
    hidden_vmem = 2 * (tm * twoE * 2 + twoE * H * 2 + H * 4
                       + H * E * 2 + E * 4 + tm * E * 2) + (2 << 20)
    h_pad = pl.pallas_call(
        _hidden_mlp_kernel,
        out_shape=jax.ShapeDtypeStruct((M_pad, E), jnp.bfloat16),
        grid=(M_pad // tm,),
        in_specs=[
            pl.BlockSpec((tm, twoE), lambda i: (i, 0)),
            pl.BlockSpec((twoE, H), lambda i: (0, 0)),
            pl.BlockSpec((1, H), lambda i: (0, 0)),
            pl.BlockSpec((H, E), lambda i: (0, 0)),
            pl.BlockSpec((1, E), lambda i: (0, 0)),
        ],
        out_specs=pl.BlockSpec((tm, E), lambda i: (i, 0)),
        compiler_params=pltpu.CompilerParams(
            dimension_semantics=("parallel",),
            vmem_limit_bytes=_clamp_vmem(hidden_vmem)),
        cost_estimate=pl.CostEstimate(
            flops=2 * M_pad * (twoE * H + H * E),
            transcendentals=0,
            bytes_accessed=(M_pad * twoE + twoE * H + H * E + M_pad * E) * 2),
    )(x_pad, w1, b1, w2, b2)

    # ---- denoise: grid = (vocab OUTER, rows INNER) --------------------------
    # W3 tile index is constant across the inner row axis -> stays resident in
    # VMEM; only the small (tm, E) h tile and the (tm, tv) output tile move.
    denoise_vmem = 2 * (tm * E * 2 + E * tv * 2 + tv * 4 + tm * tv * 4) + (2 << 20)
    logits_pad = pl.pallas_call(
        _denoise_kernel,
        out_shape=jax.ShapeDtypeStruct((M_pad, V), jnp.float32),
        grid=(V // tv, M_pad // tm),
        in_specs=[
            pl.BlockSpec((tm, E), lambda j, i: (i, 0)),
            pl.BlockSpec((E, tv), lambda j, i: (0, j)),
            pl.BlockSpec((1, tv), lambda j, i: (0, j)),
        ],
        out_specs=pl.BlockSpec((tm, tv), lambda j, i: (i, j)),
        compiler_params=pltpu.CompilerParams(
            dimension_semantics=("parallel", "parallel"),
            vmem_limit_bytes=_clamp_vmem(denoise_vmem)),
        cost_estimate=pl.CostEstimate(
            flops=2 * M_pad * E * V,
            transcendentals=0,
            bytes_accessed=M_pad * E * 2 + E * V * 2 + V * 4 + M_pad * V * 4),
    )(h_pad, w3, b3)

    return logits_pad[:M]


# ----------------------------------------------------------------------------
# Parameter setup (deterministic), mirroring MDBBlock.__init__ for tier='simple'
# ----------------------------------------------------------------------------
def _quantize(w):
    # MDBBlock._quantize_weights: round(w * 15) / 15
    return jnp.round(w * 15.0) / 15.0


def init_params(key, vocab_size, embed_dim, hidden_dim):
    k_emb, k1, k1b, k2, k2b, k3, k3b = jax.random.split(key, 7)
    E, H, V = embed_dim, hidden_dim, vocab_size

    emb = jax.random.normal(k_emb, (V, E), jnp.float32)

    def lin(kw, kb, fan_in, fan_out):
        bound = 1.0 / math.sqrt(fan_in)
        w = jax.random.uniform(kw, (fan_in, fan_out), jnp.float32, -bound, bound)
        b = jax.random.uniform(kb, (1, fan_out), jnp.float32, -bound, bound)
        return w, b

    w1, b1 = lin(k1, k1b, 2 * E, H)   # mamba: Linear(2E -> H)
    w2, b2 = lin(k2, k2b, H, E)       # mamba: Linear(H -> E)
    w3, b3 = lin(k3, k3b, E, V)       # denoise: Linear(E -> V)

    params = {"emb": emb, "w1": w1, "b1": b1, "w2": w2, "b2": b2,
              "w3": w3, "b3": b3}
    return {k: _quantize(v) for k, v in params.items()}


# ----------------------------------------------------------------------------
# JAX glue: block split, masking, embedding gather, x_prev mean  -> x_cat rows
# ----------------------------------------------------------------------------
def build_mlp_inputs(x, params, *, l_prime, vocab_size, mask_key):
    B, S = x.shape
    padded_len = math.ceil(S / l_prime) * l_prime
    x_padded = jnp.pad(x, ((0, 0), (0, padded_len - S)), constant_values=0)
    blocks = x_padded.reshape(B, -1, l_prime)          # (B, n_blocks, L)
    n_blocks = blocks.shape[1]

    emb = params["emb"]
    per_block = []
    key = mask_key
    for b in range(n_blocks):
        key, sub = jax.random.split(key)
        x_b = blocks[:, b]                              # (B, L)
        # _mask_tokens with ratio 0.5 (tier='simple')
        mask = jax.random.uniform(sub, x_b.shape) < 0.5
        x_t_b = jnp.where(mask, vocab_size - 1, x_b)

        x_t_embed = emb[x_t_b]                          # (B, L, E)
        if b > 0:
            x_prev = blocks[:, :b].reshape(B, -1)       # (B, b*L)
        else:
            # PyTorch: zeros(batch, 1, long) -> context = embedding of token 0.
            x_prev = jnp.zeros((B, 1), dtype=jnp.int32)
        x_prev_mean = emb[x_prev].mean(axis=1)          # (B, E)
        x_prev_exp = jnp.broadcast_to(x_prev_mean[:, None, :], x_t_embed.shape)
        per_block.append(
            jnp.concatenate([x_t_embed, x_prev_exp], axis=-1))   # (B, L, 2E)

    x_cat = jnp.stack(per_block, axis=1)                # (B, n_blocks, L, 2E)
    M = B * n_blocks * l_prime
    E = emb.shape[1]
    return x_cat.reshape(M, 2 * E).astype(jnp.float32), n_blocks


# ----------------------------------------------------------------------------
# MBDS.forward (tier='simple', targets=None): logits only
# ----------------------------------------------------------------------------
def mbds_forward(x, params, *, l_prime, vocab_size, mask_key):
    B = x.shape[0]
    x_flat, n_blocks = build_mlp_inputs(
        x, params, l_prime=l_prime, vocab_size=vocab_size, mask_key=mask_key)
    logits_flat = mdb_mlp_pallas(x_flat, params)        # (M, V) via Pallas
    logits = logits_flat.reshape(B, n_blocks, l_prime, vocab_size)
    # TODO(synk): fused cross-entropy over vocab tiles (targets path) would
    # remove the (M, V) logits writeback entirely; loss left in JAX-land.
    return logits, None


# ----------------------------------------------------------------------------
# Pure-JAX reference of the hot path (same bf16 casts as the kernels, so the
# only remaining difference is MXU f32-accumulation order).
# ----------------------------------------------------------------------------
def _mlp_reference(x_flat, p):
    bf = lambda a: a.astype(jnp.bfloat16).astype(jnp.float32)
    h1 = jnp.maximum(bf(x_flat) @ bf(p["w1"]) + p["b1"], 0.0)
    h2 = bf(h1) @ bf(p["w2"]) + p["b2"]
    return bf(h2) @ bf(p["w3"]) + p["b3"]


if __name__ == "__main__":
    # Small shapes consistent with MBDS: batch=2, seq=16, l_prime=8,
    # embed_dim=32, hidden_dim=64, vocab_size=512 (multiple of 128).
    VOCAB = 512
    EMBED = 32
    HIDDEN = 64
    L_PRIME = 8
    BATCH, SEQ = 2, 16

    root = jax.random.PRNGKey(0)
    k_param, k_tokens, k_mask = jax.random.split(root, 3)

    params = init_params(k_param, VOCAB, EMBED, HIDDEN)
    x_tokens = jax.random.randint(k_tokens, (BATCH, SEQ), 0, VOCAB, dtype=jnp.int32)

    logits, loss = mbds_forward(x_tokens, params, l_prime=L_PRIME,
                                vocab_size=VOCAB, mask_key=k_mask)
    logits = jax.block_until_ready(logits)

    n_blocks = math.ceil(SEQ / L_PRIME)
    assert logits.shape == (BATCH, n_blocks, L_PRIME, VOCAB)
    assert logits.dtype == jnp.float32
    assert loss is None

    # Numerical agreement of the Pallas hot path vs pure-JAX reference.
    x_flat, _ = build_mlp_inputs(x_tokens, params, l_prime=L_PRIME,
                                 vocab_size=VOCAB, mask_key=k_mask)
    ref = _mlp_reference(x_flat, params).reshape(logits.shape)
    rel_err = jnp.max(jnp.abs(logits - ref)) / (jnp.max(jnp.abs(ref)) + 1e-6)
    assert float(rel_err) < 1e-2, f"mismatch vs reference: rel err {float(rel_err)}"

    print("KERNEL_OK")
</pallas_src>

<mosaic_0001>
module attributes {stable_mosaic.version = 11 : i64} {
  func.func @_hidden_mlp_kernel(%arg0: i32, %arg1: memref<32x64xbf16, #tpu.memory_space<vmem>>, %arg2: memref<64x64xbf16, #tpu.memory_space<vmem>>, %arg3: memref<1x64xf32, #tpu.memory_space<vmem>>, %arg4: memref<64x32xbf16, #tpu.memory_space<vmem>>, %arg5: memref<1x32xf32, #tpu.memory_space<vmem>>, %arg6: memref<32x32xbf16, #tpu.memory_space<vmem>>) attributes {dimension_semantics = [#tpu.dimension_semantics<parallel>], iteration_bounds = array<i64: 1>, scalar_prefetch = 0 : i64, scratch_operands = 0 : i64, tpu.core_type = #tpu.core_type<tc>, window_params = [{transform_indices = @transform_0, window_bounds = array<i64: 32, 64>}, {pipeline_mode = #tpu.pipeline_mode<synchronous>, transform_indices = @transform_1, window_bounds = array<i64: 64, 64>}, {pipeline_mode = #tpu.pipeline_mode<synchronous>, transform_indices = @transform_2, window_bounds = array<i64: 1, 64>}, {pipeline_mode = #tpu.pipeline_mode<synchronous>, transform_indices = @transform_3, window_bounds = array<i64: 64, 32>}, {pipeline_mode = #tpu.pipeline_mode<synchronous>, transform_indices = @transform_4, window_bounds = array<i64: 1, 32>}, {transform_indices = @transform_5, window_bounds = array<i64: 32, 32>}]} {
    %c0 = arith.constant 0 : index
    %c0_0 = arith.constant 0 : index
    %0 = vector.load %arg1[%c0, %c0_0] : memref<32x64xbf16, #tpu.memory_space<vmem>>, vector<32x64xbf16>
    %c0_1 = arith.constant 0 : index
    %c0_2 = arith.constant 0 : index
    %1 = vector.load %arg2[%c0_1, %c0_2] : memref<64x64xbf16, #tpu.memory_space<vmem>>, vector<64x64xbf16>
    %cst = arith.constant dense<0.000000e+00> : vector<32x64xf32>
    %2 = tpu.matmul %0, %1, %cst {dimension_numbers = #tpu.dot_dimension_numbers<[1], [0], [0], [1], [0, 0, 1, 1], [], []>} : vector<32x64xbf16>, vector<64x64xbf16>, vector<32x64xf32> -> vector<32x64xf32>
    %c0_3 = arith.constant 0 : index
    %c0_4 = arith.constant 0 : index
    %3 = vector.load %arg3[%c0_3, %c0_4] : memref<1x64xf32, #tpu.memory_space<vmem>>, vector<1x64xf32>
    %4 = vector.broadcast %3 : vector<1x64xf32> to vector<32x64xf32>
    %5 = arith.addf %2, %4 : vector<32x64xf32>
    %cst_5 = arith.constant 0.000000e+00 : f32
    %6 = vector.broadcast %cst_5 : f32 to vector<32x64xf32>
    %7 = arith.maximumf %5, %6 : vector<32x64xf32>
    %8 = arith.truncf %7 : vector<32x64xf32> to vector<32x64xbf16>
    %c0_6 = arith.constant 0 : index
    %c0_7 = arith.constant 0 : index
    %9 = vector.load %arg4[%c0_6, %c0_7] : memref<64x32xbf16, #tpu.memory_space<vmem>>, vector<64x32xbf16>
    %cst_8 = arith.constant dense<0.000000e+00> : vector<32x32xf32>
    %10 = tpu.matmul %8, %9, %cst_8 {dimension_numbers = #tpu.dot_dimension_numbers<[1], [0], [0], [1], [0, 0, 1, 1], [], []>} : vector<32x64xbf16>, vector<64x32xbf16>, vector<32x32xf32> -> vector<32x32xf32>
    %c0_9 = arith.constant 0 : index
    %c0_10 = arith.constant 0 : index
    %11 = vector.load %arg5[%c0_9, %c0_10] : memref<1x32xf32, #tpu.memory_space<vmem>>, vector<1x32xf32>
    %12 = vector.broadcast %11 : vector<1x32xf32> to vector<32x32xf32>
    %13 = arith.addf %10, %12 : vector<32x32xf32>
    %14 = arith.truncf %13 : vector<32x32xf32> to vector<32x32xbf16>
    %c0_11 = arith.constant 0 : index
    %c0_12 = arith.constant 0 : index
    %15 = vector.load %arg6[%c0_11, %c0_12] : memref<32x32xbf16, #tpu.memory_space<vmem>>, vector<32x32xbf16>
    tpu.vector_store %arg6[%c0_11, %c0_12], %14 {strides = array<i32>} : memref<32x32xbf16, #tpu.memory_space<vmem>>, vector<32x32xbf16>,
    return
  }
  func.func @transform_0(%arg0: i32) -> (i32, i32) {
    %c0_i32 = arith.constant 0 : i32
    %c0_i32_0 = arith.constant 0 : i32
    return %arg0, %c0_i32 : i32, i32
  }
  func.func @transform_1(%arg0: i32) -> (i32, i32) {
    %c0_i32 = arith.constant 0 : i32
    %c0_i32_0 = arith.constant 0 : i32
    %c0_i32_1 = arith.constant 0 : i32
    return %c0_i32, %c0_i32_0 : i32, i32
  }
  func.func @transform_2(%arg0: i32) -> (i32, i32) {
    %c0_i32 = arith.constant 0 : i32
    %c0_i32_0 = arith.constant 0 : i32
    %c0_i32_1 = arith.constant 0 : i32
    return %c0_i32, %c0_i32_0 : i32, i32
  }
  func.func @transform_3(%arg0: i32) -> (i32, i32) {
    %c0_i32 = arith.constant 0 : i32
    %c0_i32_0 = arith.constant 0 : i32
    %c0_i32_1 = arith.constant 0 : i32
    return %c0_i32, %c0_i32_0 : i32, i32
  }
  func.func @transform_4(%arg0: i32) -> (i32, i32) {
    %c0_i32 = arith.constant 0 : i32
    %c0_i32_0 = arith.constant 0 : i32
    %c0_i32_1 = arith.constant 0 : i32
    return %c0_i32, %c0_i32_0 : i32, i32
  }
  func.func @transform_5(%arg0: i32) -> (i32, i32) {
    %c0_i32 = arith.constant 0 : i32
    %c0_i32_0 = arith.constant 0 : i32
    return %arg0, %c0_i32 : i32, i32
  }
}

</mosaic_0001>

<llo_original>
// kernel: tpu_custom_call.1
$region0: #{tpu_custom_call.1}
  #allocation0 [shape = 'u32[]', space=smem, size = 0x4, offset = 0x4, fixed_abs, tag = 'smem constant byte address 0x4 - core index']
  #allocation1 [shape = 'u32[144,128]{1,0:T(1,128)}', space=vmem, size = 0x12000, scoped, tag = 'internal scratch']
  %s0 = inlined_call_operand.vmem [shape: bf16[32,64], index: 0, kind: input, shape index: {}]
  %s1 = inlined_call_operand.vmem [shape: bf16[64,64], index: 1, kind: input, shape index: {}]
  %s2 = inlined_call_operand.vmem [shape: f32[1,64], index: 2, kind: input, shape index: {}]
  %s3 = inlined_call_operand.vmem [shape: bf16[64,32], index: 3, kind: input, shape index: {}]
  %s4 = inlined_call_operand.vmem [shape: f32[1,32], index: 4, kind: input, shape index: {}]
  %s5 = inlined_call_operand.hbm [shape: bf16[32,32], index: 5, kind: output, shape index: {}]
  %s6 = sld [smem:[#allocation0]]
  $region30: #{tpu_custom_call.1} parent=0
    _
  %s8 = ssub.s32 1, %s6
  %s9 = scalar_select 0, %s8, %s6
  $region1: #{tpu_custom_call.1} parent=0
    #allocation2 [shape = 'u8[8192]{0}', space=vmem, size = 0x2000, scoped, tag = 'output window, operand 0, single buffered']
    #allocation3 [shape = 's32[1]{0}', space=sflag, size = 0x4, scoped, tag = 'scoped memory for tpu_custom_call.1']
    %10 = vsyncpa [#allocation3], 0
    // Predicated region
    $region2: #{tpu_custom_call.1} parent=1 // pred_check
      _
    $region3: #{tpu_custom_call.1} parent=1 // pred_check_branch
      %12 = sbr.rel (0) target = $region5
    $region4: #{tpu_custom_call.1} parent=1 // pred_region
      _
    $region5: #{tpu_custom_call.1} parent=1 // pred_fallthru
      _
    // Predicated region
    $region6: #{tpu_custom_call.1} parent=1 // pred_check
      _
    $region7: #{tpu_custom_call.1} parent=1 // pred_check_branch
      %14 = sbr.rel (0) target = $region9
    $region8: #{tpu_custom_call.1} parent=1 // pred_region
      _
    $region9: #{tpu_custom_call.1} parent=1 // pred_fallthru
      _
    // Predicated region
    $region10: #{tpu_custom_call.1} parent=1 // pred_check
      _
    $region11: #{tpu_custom_call.1} parent=1 // pred_check_branch
      %16 = sbr.rel (0) target = $region13
    $region12: #{tpu_custom_call.1} parent=1 // pred_region
      _
    $region13: #{tpu_custom_call.1} parent=1 // pred_fallthru
      _
    // Predicated region
    $region14: #{tpu_custom_call.1} parent=1 // pred_check
      _
    $region15: #{tpu_custom_call.1} parent=1 // pred_check_branch
      %18 = sbr.rel (0) target = $region17
    $region16: #{tpu_custom_call.1} parent=1 // pred_region
      _
    $region17: #{tpu_custom_call.1} parent=1 // pred_fallthru
      _
    // Predicated region
    $region18: #{tpu_custom_call.1} parent=1 // pred_check
      _
    $region19: #{tpu_custom_call.1} parent=1 // pred_check_branch
      %20 = sbr.rel (0) target = $region21
    $region20: #{tpu_custom_call.1} parent=1 // pred_region
      _
    $region21: #{tpu_custom_call.1} parent=1 // pred_fallthru
      _
    %v22 = vld [vmem:[%s0] sm:$0xf]
    %v23 = vld [vmem:[%s0 + $0x4] sm:$0xf]
    %v24 = vld [vmem:[%s0 + $0x8] sm:$0xf]
    %v25 = vld [vmem:[%s0 + $0xc] sm:$0xf]
    %v26 = vld [vmem:[%s1] sm:$0xf]
    %v27 = vld [vmem:[%s1 + $0x4] sm:$0xf]
    %v28 = vld [vmem:[%s1 + $0x8] sm:$0xf]
    %v29 = vld [vmem:[%s1 + $0xc] sm:$0xf]
    %v30 = vld [vmem:[%s1 + $0x10] sm:$0xf]
    %v31 = vld [vmem:[%s1 + $0x14] sm:$0xf]
    %v32 = vld [vmem:[%s1 + $0x18] sm:$0xf]
    %v33 = vld [vmem:[%s1 + $0x1c] sm:$0xf]
    %v34 = vld [vmem:[%s2] sm:$0x1]
    %v36 = vlaneseq
    %v37 = vshrl.u32 %v36, 7
    %v38 = vsub.s32 0, %v37
    %v39 = vrot.slane %v34, %v38
    %v45 = vunpack.c.l.b16 %v22
    %v46 = vunpack.c.l.b16 %v23
    %v47 = vunpack.c.l.b16 %v24
    %v48 = vunpack.c.l.b16 %v25
    %v49 = vpack.c.b16 %v46, %v45
    %v50 = vpack.c.b16 %v48, %v47
    %v59 = vunpack.c.l.b16 %v26
    %v60 = vunpack.c.l.b16 %v27
    %v61 = vunpack.c.l.b16 %v28
    %v62 = vunpack.c.l.b16 %v29
    %v63 = vunpack.c.l.b16 %v30
    %v64 = vunpack.c.l.b16 %v31
    %v65 = vunpack.c.l.b16 %v32
    %v66 = vunpack.c.l.b16 %v33
    %v67 = vpack.c.b16 %v60, %v59
    %v68 = vpack.c.b16 %v62, %v61
    %v69 = vpack.c.b16 %v64, %v63
    %v70 = vpack.c.b16 %v66, %v65
    %vm75 = vcmask 523264
    %v77 = vsel %vm75, %v49, 0
    %v80 = vsel %vm75, %v50, 0
    %82 = vmatprep.subr.bf16.mxu0 0
    %83 = vmatpush1.bf16.msra.mxu0 %v67
    %84 = vmatprep.subr.bf16.mxu0 0
    %85 = vmatpush1.bf16.msra.mxu0 %v68
    %86 = vmatprep.subr.bf16.mxu0 0
    %87 = vmatpush1.bf16.msra.mxu0 %v69
    %88 = vmatprep.subr.bf16.mxu0 0
    %89 = vmatpush1.bf16.msra.mxu0 %v70
    %90 = vmatprep.subr.bf16.mxu0 0
    %91 = vmatpush1.bf16.msra.mxu0 0
    %92 = vmatprep.subr.bf16.mxu0 0
    %93 = vmatpush1.bf16.msra.mxu0 0
    %94 = vmatprep.subr.bf16.mxu0 0
    %95 = vmatpush1.bf16.msra.mxu0 0
    %96 = vmatprep.subr.bf16.mxu0 0
    %97 = vmatpush1.bf16.msra.mxu0 0
    %98 = vmatprep.subr.bf16.mxu0 0
    %99 = vmatpush1.bf16.msra.mxu0 0
    %100 = vmatprep.subr.bf16.mxu0 0
    %101 = vmatpush1.bf16.msra.mxu0 0
    %102 = vmatprep.subr.bf16.mxu0 0
    %103 = vmatpush1.bf16.msra.mxu0 0
    %104 = vmatprep.subr.bf16.mxu0 0
    %105 = vmatpush1.bf16.msra.mxu0 0
    %106 = vmatprep.subr.bf16.mxu0 0
    %107 = vmatpush1.bf16.msra.mxu0 0
    %108 = vmatprep.subr.bf16.mxu0 0
    %109 = vmatpush1.bf16.msra.mxu0 0
    %110 = vmatprep.subr.bf16.mxu0 0
    %111 = vmatpush1.bf16.msra.mxu0 0
    %112 = vmatprep.subr.bf16.mxu0 0
    %113 = vmatpush1.bf16.msra.mxu0 0
    %114 = vmatprep.mubr.bf16.mxu0 0
    %115 = vmatmul.mubr.bf16.gmra.mrb[0].mxu0 %v77
    %v116 = vpop.f32.mrb[0].mxu0
    %v117 = vadd.f32 %v39, %v116
    %v118 = vpop.f32.mrb[0].mxu0
    %v119 = vpop.f32.mrb[0].mxu0
    %v120 = vadd.f32 %v39, %v119
    %v121 = vpop.f32.mrb[0].mxu0
    %122 = vmatprep.mubr.bf16.mxu0 0
    %123 = vmatmul.mubr.bf16.gmra.mrb[0].mxu0 %v80
    %v124 = vpop.f32.mrb[0].mxu0
    %v125 = vadd.f32 %v39, %v124
    %v126 = vpop.f32.mrb[0].mxu0
    %v127 = vpop.f32.mrb[0].mxu0
    %v128 = vadd.f32 %v39, %v127
    %v129 = vpop.f32.mrb[0].mxu0
    %130 = vdwg.mxu0
    %v131 = vmax.f32 %v117, 0.0
    %v132 = vmax.f32 %v120, 0.0
    %v133 = vmax.f32 %v125, 0.0
    %v134 = vmax.f32 %v128, 0.0
    %v135 = vpack.c.bf16 %v132, %v131
    %v136 = vpack.c.bf16 %v134, %v133
    %v137 = vld [vmem:[%s3] sm:$0xf]
    %v138 = vld [vmem:[%s3 + $0x4] sm:$0xf]
    %v139 = vld [vmem:[%s3 + $0x8] sm:$0xf]
    %v140 = vld [vmem:[%s3 + $0xc] sm:$0xf]
    %v141 = vld [vmem:[%s3 + $0x10] sm:$0xf]
    %v142 = vld [vmem:[%s3 + $0x14] sm:$0xf]
    %v143 = vld [vmem:[%s3 + $0x18] sm:$0xf]
    %v144 = vld [vmem:[%s3 + $0x1c] sm:$0xf]
    %v145 = vld [vmem:[%s4] sm:$0x1]
    %v147 = vlaneseq
    %v148 = vshrl.u32 %v147, 7
    %v149 = vsub.s32 0, %v148
    %v150 = vrot.slane %v145, %v149
    %v160 = vunpack.c.l.b16 %v137
    %v161 = vunpack.c.l.b16 %v138
    %v162 = vunpack.c.l.b16 %v139
    %v163 = vunpack.c.l.b16 %v140
    %v164 = vunpack.c.l.b16 %v141
    %v165 = vunpack.c.l.b16 %v142
    %v166 = vunpack.c.l.b16 %v143
    %v167 = vunpack.c.l.b16 %v144
    %v168 = vpack.c.b16 %v161, %v160
    %v169 = vpack.c.b16 %v163, %v162
    %v170 = vpack.c.b16 %v165, %v164
    %v171 = vpack.c.b16 %v167, %v166
    %v177 = vsel %vm75, %v135, 0
    %v180 = vsel %vm75, %v136, 0
    %182 = vmatprep.subr.bf16.mxu0 0
    %183 = vmatpush1.bf16.msra.mxu0 %v168
    %184 = vmatprep.subr.bf16.mxu0 0
    %185 = vmatpush1.bf16.msra.mxu0 %v169
    %186 = vmatprep.subr.bf16.mxu0 0
    %187 = vmatpush1.bf16.msra.mxu0 %v170
    %188 = vmatprep.subr.bf16.mxu0 0
    %189 = vmatpush1.bf16.msra.mxu0 %v171
    %190 = vmatprep.subr.bf16.mxu0 0
    %191 = vmatpush1.bf16.msra.mxu0 0
    %192 = vmatprep.subr.bf16.mxu0 0
    %193 = vmatpush1.bf16.msra.mxu0 0
    %194 = vmatprep.subr.bf16.mxu0 0
    %195 = vmatpush1.bf16.msra.mxu0 0
    %196 = vmatprep.subr.bf16.mxu0 0
    %197 = vmatpush1.bf16.msra.mxu0 0
    %198 = vmatprep.subr.bf16.mxu0 0
    %199 = vmatpush1.bf16.msra.mxu0 0
    %200 = vmatprep.subr.bf16.mxu0 0
    %201 = vmatpush1.bf16.msra.mxu0 0
    %202 = vmatprep.subr.bf16.mxu0 0
    %203 = vmatpush1.bf16.msra.mxu0 0
    %204 = vmatprep.subr.bf16.mxu0 0
    %205 = vmatpush1.bf16.msra.mxu0 0
    %206 = vmatprep.subr.bf16.mxu0 0
    %207 = vmatpush1.bf16.msra.mxu0 0
    %208 = vmatprep.subr.bf16.mxu0 0
    %209 = vmatpush1.bf16.msra.mxu0 0
    %210 = vmatprep.subr.bf16.mxu0 0
    %211 = vmatpush1.bf16.msra.mxu0 0
    %212 = vmatprep.subr.bf16.mxu0 0
    %213 = vmatpush1.bf16.msra.mxu0 0
    %214 = vmatprep.mubr.bf16.mxu0 0
    %215 = vmatmul.mubr.bf16.gmra.mrb[0].mxu0 %v177
    %v216 = vpop.f32.mrb[0].mxu0
    %v217 = vadd.f32 %v150, %v216
    %v218 = vpop.f32.mrb[0].mxu0
    %v219 = vpop.f32.mrb[0].mxu0
    %v220 = vadd.f32 %v150, %v219
    %v221 = vpop.f32.mrb[0].mxu0
    %222 = vmatprep.mubr.bf16.mxu0 0
    %223 = vmatmul.mubr.bf16.gmra.mrb[0].mxu0 %v180
    %v224 = vpop.f32.mrb[0].mxu0
    %v225 = vadd.f32 %v150, %v224
    %v226 = vpop.f32.mrb[0].mxu0
    %v227 = vpop.f32.mrb[0].mxu0
    %v228 = vadd.f32 %v150, %v227
    %v229 = vpop.f32.mrb[0].mxu0
    %230 = vdwg.mxu0
    %v231 = vpack.c.bf16 %v220, %v217
    %v232 = vpack.c.bf16 %v228, %v225
    %v235 = vunpack.c.l.b16 %v231
    %v236 = vunpack.c.h.b16 %v231
    %v237 = vunpack.c.l.b16 %v232
    %v238 = vunpack.c.h.b16 %v232
    %v239 = vpack.c.b16 %v235, %v235
    %v240 = vpack.c.b16 %v236, %v236
    %v241 = vpack.c.b16 %v237, %v237
    %v242 = vpack.c.b16 %v238, %v238
    %vm247 = vcmask 257024
    %248 = vst.msk [vmem:[#allocation2] sm:$0xf] %vm247, %v239
    %249 = vst.msk [vmem:[#allocation2 + $0x4] sm:$0xf] %vm247, %v240
    %250 = vst.msk [vmem:[#allocation2 + $0x8] sm:$0xf] %vm247, %v241
    %251 = vst.msk [vmem:[#allocation2 + $0xc] sm:$0xf] %vm247, %v242
    // Predicated region
    $region22: #{tpu_custom_call.1} parent=1 // pred_check
      _
    $region23: #{tpu_custom_call.1} parent=1 // pred_check_branch
      %253 = sbr.rel (0) target = $region25
    $region24: #{tpu_custom_call.1} parent=1 // pred_region
      %s255 = ssub.s32 256, 256
      %256 = vsyncadd [#allocation3], %s255
      %s257 = sshll.u32 [#allocation2], 4
      %s258 = int_to_ptr.vmem [resolvable:$true] %s257
      %263 = dma.vmem_to_hbm [thread:$0]  %s258, 256, %s5, [#allocation3], 64, 64, 4
    $region25: #{tpu_custom_call.1} parent=1 // pred_fallthru
      _
    // Predicated region
    $region26: #{tpu_custom_call.1} parent=1 // pred_check
      _
    $region27: #{tpu_custom_call.1} parent=1 // pred_check_branch
      %265 = sbr.rel (0) target = $region29
    $region28: #{tpu_custom_call.1} parent=1 // pred_region
      %266 = dma.done [#allocation3], 256
    $region29: #{tpu_custom_call.1} parent=1 // pred_fallthru
      _
    %267 = vsyncpa [#allocation3], 1

</llo_original>
